<compile_context>
chip_gen: v6e
topology: v6e:2x2x1
jax: 0.10.0
libtpu: 0.0.40
codegen_flags: <defaults>
</compile_context>

<pallas_src>
import functools

import jax
import jax.numpy as jnp
from jax.experimental import pallas as pl
from jax.experimental.pallas import tpu as pltpu

_LANE = 128


def _round_up(x, m):
    return ((x + m - 1) // m) * m


def _batchnorm_kernel(x_ref, gamma_ref, beta_ref, o_ref, *, eps, inv_n):
    # x_ref: (N, TILE_D), gamma_ref/beta_ref: (1, TILE_D), o_ref: (N, TILE_D)
    x = x_ref[...].astype(jnp.float32)

    # mean over batch (dim 0); 1/N folded into a multiply
    mean = jnp.sum(x, axis=0, keepdims=True) * inv_n              # (1, TILE_D)

    # biased variance (unbiased=False), two-pass form (matches torch reference
    # numerically better than E[x^2]-mean^2)
    x_mean = x - mean
    var = jnp.sum(x_mean * x_mean, axis=0, keepdims=True) * inv_n

    inv_std = jax.lax.rsqrt(var + eps)                            # EUP rsqrt

    # fused affine: out = x*scale + shift  ==  gamma*(x-mean)*inv_std + beta
    scale = gamma_ref[...].astype(jnp.float32) * inv_std          # (1, TILE_D)
    shift = beta_ref[...].astype(jnp.float32) - mean * scale      # (1, TILE_D)

    o_ref[...] = (x * scale + shift).astype(o_ref.dtype)


def custom_batchnorm_forward(x, gamma, beta, eps=1e-5, max_tile_d=2048):
    """x: (N, D) float32; gamma, beta: (D,) float32."""
    n, d = x.shape
    assert gamma.shape == (d,) and beta.shape == (d,)
    max_tile_d = max(_LANE, int(max_tile_d))

    d128 = _round_up(d, _LANE)

    # --- generation-aware VMEM sizing ---------------------------------------
    try:
        vmem_cap = int(getattr(pltpu.get_tpu_info(), "vmem_capacity_bytes", 0))
    except Exception:
        vmem_cap = 0
    if vmem_cap < 8 * 1024 * 1024:
        vmem_cap = 64 * 1024 * 1024  # conservative fallback (v7x physical VMEM)

    # live f32 tiles of shape (n, tile_d) per grid step:
    #   2 double-buffered input tiles + 2 double-buffered output tiles
    #   + ~2 in-kernel temporaries (f32 cast of x / x_mean / pre-store value)
    tiles_per_step = 6
    bytes_per_col = 4 * n * tiles_per_step
    step_budget = vmem_cap // 2                 # leave headroom
    cols_by_budget = (step_budget // bytes_per_col) // _LANE * _LANE
    if cols_by_budget < _LANE:
        # TODO(synk): implement the N-axis reduction grid for huge batches.
        raise NotImplementedError(
            f"batch size n={n} too large for a single (n, 128) column slab "
            f"within the VMEM budget ({vmem_cap} bytes); N-axis reduction "
            "grid not implemented yet.")

    # Keep >= ~8 grid steps when D is large so double-buffering overlaps DMA
    # with compute and both v7x TensorCores get work.
    cols_by_steps = max(_LANE, (d128 // 8) // _LANE * _LANE)

    tile_d = min(d128, max_tile_d, cols_by_budget, cols_by_steps)

    gamma2d = gamma.reshape(1, d)
    beta2d = beta.reshape(1, d)

    kernel = functools.partial(_batchnorm_kernel, eps=float(eps), inv_n=1.0 / n)

    # cdiv grid: ragged final block handled by Pallas (garbage OOB-read columns
    # stay in their own lanes; OOB writes are masked) -> no pad/slice HBM passes.
    grid = (pl.cdiv(d, tile_d),)

    vmem_limit = min(int(vmem_cap * 0.75), 100 * 1024 * 1024)

    out = pl.pallas_call(
        kernel,
        out_shape=jax.ShapeDtypeStruct((n, d), x.dtype),
        grid=grid,
        in_specs=[
            pl.BlockSpec((n, tile_d), lambda j: (0, j)),
            pl.BlockSpec((1, tile_d), lambda j: (0, j)),
            pl.BlockSpec((1, tile_d), lambda j: (0, j)),
        ],
        out_specs=pl.BlockSpec((n, tile_d), lambda j: (0, j)),
        compiler_params=pltpu.CompilerParams(
            dimension_semantics=("parallel",),
            vmem_limit_bytes=vmem_limit,
        ),
    )(x, gamma2d, beta2d)

    return out


class CustomBatchNormManual:
    """JAX/Pallas mirror of CustomBatchNormManualModule (forward only)."""

    def __init__(self, n_neurons, eps=1e-5):
        self.n_neurons = n_neurons
        self.eps = eps
        # deterministic init matching nn.Parameter(torch.ones/zeros)
        self.gamma = jnp.ones((n_neurons,), dtype=jnp.float32)
        self.beta = jnp.zeros((n_neurons,), dtype=jnp.float32)

    def __call__(self, x, **kwargs):
        assert x.shape[1] == self.n_neurons, (
            "The shape of the input tensor is not correct."
        )
        return custom_batchnorm_forward(x, self.gamma, self.beta, self.eps, **kwargs)


def _jax_reference(x, gamma, beta, eps):
    mean = jnp.mean(x, axis=0)
    var = jnp.mean((x - mean) ** 2, axis=0)
    return gamma * ((x - mean) / jnp.sqrt(var + eps)) + beta


if __name__ == "__main__":
    key = jax.random.PRNGKey(0)
    k1, k2, k3 = jax.random.split(key, 3)

    # --- case 1: typical small MLP shape, single ragged block (D < 128) -----
    n_batch, n_neurons = 8, 32
    x = jax.random.normal(k1, (n_batch, n_neurons), dtype=jnp.float32) * 2.0 + 1.5
    module = CustomBatchNormManual(n_neurons, eps=1e-5)
    out = jax.block_until_ready(module(x))
    ref = _jax_reference(x, module.gamma, module.beta, 1e-5)
    assert jnp.allclose(out, ref, atol=1e-5, rtol=1e-5), "case 1 mismatch"

    # --- case 2: multi-step grid with ragged final block (D % tile_d != 0) --
    n_batch2, n_neurons2 = 16, 300
    x2 = jax.random.normal(k2, (n_batch2, n_neurons2), dtype=jnp.float32) * 0.7 - 0.3
    module2 = CustomBatchNormManual(n_neurons2, eps=1e-5)
    out2 = jax.block_until_ready(module2(x2, max_tile_d=128))   # grid of 3 steps
    ref2 = _jax_reference(x2, module2.gamma, module2.beta, 1e-5)
    assert jnp.allclose(out2, ref2, atol=1e-5, rtol=1e-5), "case 2 mismatch"

    # --- case 3: default tile selection, lane-aligned D, many grid steps ----
    n_batch3, n_neurons3 = 8, 1152
    x3 = jax.random.normal(k3, (n_batch3, n_neurons3), dtype=jnp.float32) * 1.3 + 0.2
    module3 = CustomBatchNormManual(n_neurons3, eps=1e-5)
    out3 = jax.block_until_ready(module3(x3))
    ref3 = _jax_reference(x3, module3.gamma, module3.beta, 1e-5)
    assert jnp.allclose(out3, ref3, atol=1e-5, rtol=1e-5), "case 3 mismatch"

    print("KERNEL_OK")
</pallas_src>

<mosaic_0001>
module attributes {stable_mosaic.version = 11 : i64} {
  func.func @_batchnorm_kernel(%arg0: i32, %arg1: memref<8x128xf32, #tpu.memory_space<vmem>>, %arg2: memref<1x128xf32, #tpu.memory_space<vmem>>, %arg3: memref<1x128xf32, #tpu.memory_space<vmem>>, %arg4: memref<8x128xf32, #tpu.memory_space<vmem>>) attributes {dimension_semantics = [#tpu.dimension_semantics<parallel>], iteration_bounds = array<i64: 1>, scalar_prefetch = 0 : i64, scratch_operands = 0 : i64, tpu.core_type = #tpu.core_type<tc>, window_params = [{transform_indices = @transform_0, window_bounds = array<i64: 8, 128>}, {transform_indices = @transform_1, window_bounds = array<i64: 1, 128>}, {transform_indices = @transform_2, window_bounds = array<i64: 1, 128>}, {transform_indices = @transform_3, window_bounds = array<i64: 8, 128>}]} {
    %c0 = arith.constant 0 : index
    %c0_0 = arith.constant 0 : index
    %0 = vector.load %arg1[%c0, %c0_0] : memref<8x128xf32, #tpu.memory_space<vmem>>, vector<8x128xf32>
    %cst = arith.constant dense<0.000000e+00> : vector<128xf32>
    %1 = vector.multi_reduction <add>, %0, %cst [0] : vector<8x128xf32> to vector<128xf32>
    %2 = vector.shape_cast %1 : vector<128xf32> to vector<1x128xf32>
    %cst_1 = arith.constant 1.250000e-01 : f32
    %3 = vector.broadcast %cst_1 : f32 to vector<1x128xf32>
    %4 = arith.mulf %2, %3 : vector<1x128xf32>
    %5 = vector.broadcast %4 : vector<1x128xf32> to vector<8x128xf32>
    %6 = arith.subf %0, %5 : vector<8x128xf32>
    %7 = arith.mulf %6, %6 : vector<8x128xf32>
    %cst_2 = arith.constant dense<0.000000e+00> : vector<128xf32>
    %8 = vector.multi_reduction <add>, %7, %cst_2 [0] : vector<8x128xf32> to vector<128xf32>
    %9 = vector.shape_cast %8 : vector<128xf32> to vector<1x128xf32>
    %cst_3 = arith.constant 1.250000e-01 : f32
    %10 = vector.broadcast %cst_3 : f32 to vector<1x128xf32>
    %11 = arith.mulf %9, %10 : vector<1x128xf32>
    %cst_4 = arith.constant 9.99999974E-6 : f32
    %12 = vector.broadcast %cst_4 : f32 to vector<1x128xf32>
    %13 = arith.addf %11, %12 : vector<1x128xf32>
    %14 = math.rsqrt %13 : vector<1x128xf32>
    %c0_5 = arith.constant 0 : index
    %c0_6 = arith.constant 0 : index
    %15 = vector.load %arg2[%c0_5, %c0_6] : memref<1x128xf32, #tpu.memory_space<vmem>>, vector<1x128xf32>
    %16 = arith.mulf %15, %14 : vector<1x128xf32>
    %c0_7 = arith.constant 0 : index
    %c0_8 = arith.constant 0 : index
    %17 = vector.load %arg3[%c0_7, %c0_8] : memref<1x128xf32, #tpu.memory_space<vmem>>, vector<1x128xf32>
    %18 = arith.mulf %4, %16 : vector<1x128xf32>
    %19 = arith.subf %17, %18 : vector<1x128xf32>
    %20 = vector.broadcast %16 : vector<1x128xf32> to vector<8x128xf32>
    %21 = arith.mulf %0, %20 : vector<8x128xf32>
    %22 = vector.broadcast %19 : vector<1x128xf32> to vector<8x128xf32>
    %23 = arith.addf %21, %22 : vector<8x128xf32>
    %c0_9 = arith.constant 0 : index
    %c0_10 = arith.constant 0 : index
    %24 = vector.load %arg4[%c0_9, %c0_10] : memref<8x128xf32, #tpu.memory_space<vmem>>, vector<8x128xf32>
    tpu.vector_store %arg4[%c0_9, %c0_10], %23 {strides = array<i32>} : memref<8x128xf32, #tpu.memory_space<vmem>>, vector<8x128xf32>,
    return
  }
  func.func @transform_0(%arg0: i32) -> (i32, i32) {
    %c0_i32 = arith.constant 0 : i32
    %c0_i32_0 = arith.constant 0 : i32
    return %c0_i32, %arg0 : i32, i32
  }
  func.func @transform_1(%arg0: i32) -> (i32, i32) {
    %c0_i32 = arith.constant 0 : i32
    %c0_i32_0 = arith.constant 0 : i32
    return %c0_i32, %arg0 : i32, i32
  }
  func.func @transform_2(%arg0: i32) -> (i32, i32) {
    %c0_i32 = arith.constant 0 : i32
    %c0_i32_0 = arith.constant 0 : i32
    return %c0_i32, %arg0 : i32, i32
  }
  func.func @transform_3(%arg0: i32) -> (i32, i32) {
    %c0_i32 = arith.constant 0 : i32
    %c0_i32_0 = arith.constant 0 : i32
    return %c0_i32, %arg0 : i32, i32
  }
}

</mosaic_0001>

<llo_original>
// kernel: tpu_custom_call.1
$region0: #{tpu_custom_call.1}
  #allocation0 [shape = 'u32[]', space=smem, size = 0x4, offset = 0x4, fixed_abs, tag = 'smem constant byte address 0x4 - core index']
  #allocation1 [shape = 'u32[144,128]{1,0:T(1,128)}', space=vmem, size = 0x12000, scoped, tag = 'internal scratch']
  %s0 = inlined_call_operand.hbm [shape: f32[8,32], index: 0, kind: input, shape index: {}]
  %s1 = inlined_call_operand.vmem [shape: f32[1,32], index: 1, kind: input, shape index: {}]
  %s2 = inlined_call_operand.vmem [shape: f32[1,32], index: 2, kind: input, shape index: {}]
  %s3 = inlined_call_operand.hbm [shape: f32[8,32], index: 3, kind: output, shape index: {}]
  %s4 = sld [smem:[#allocation0]]
  $region26: #{tpu_custom_call.1} parent=0
    _
  %s6 = ssub.s32 1, %s4
  %s7 = scalar_select 0, %s6, %s4
  $region1: #{tpu_custom_call.1} parent=0
    #allocation2 [shape = 'u8[4096]{0}', space=vmem, size = 0x1000, scoped, tag = 'input window, operand 0, single buffered']
    #allocation3 [shape = 's32[1]{0}', space=sflag, size = 0x4, scoped, tag = 'scoped memory for tpu_custom_call.1']
    #allocation4 [shape = 's32[1]{0}', space=sflag, size = 0x4, scoped, tag = 'scoped memory for tpu_custom_call.1']
    #allocation5 [shape = 'u8[4096]{0}', space=vmem, size = 0x1000, scoped, tag = 'output window, operand 0, single buffered']
    %8 = vsyncpa [#allocation3], 0
    %9 = vsyncpa [#allocation4], 0
    // Predicated region
    $region2: #{tpu_custom_call.1} parent=1 // pred_check
      _
    $region3: #{tpu_custom_call.1} parent=1 // pred_check_branch
      %11 = sbr.rel (0) target = $region5
    $region4: #{tpu_custom_call.1} parent=1 // pred_region
      %s13 = ssub.s32 128, 128
      %14 = vsyncadd [#allocation3], %s13
      %s16 = sshll.u32 [#allocation2], 4
      %s17 = int_to_ptr.vmem [resolvable:$true] %s16
      %19 = dma.hbm_to_vmem [thread:$0]  %s0, 128, %s17, [#allocation3]
    $region5: #{tpu_custom_call.1} parent=1 // pred_fallthru
      _
    // Predicated region
    $region6: #{tpu_custom_call.1} parent=1 // pred_check
      _
    $region7: #{tpu_custom_call.1} parent=1 // pred_check_branch
      %21 = sbr.rel (0) target = $region9
    $region8: #{tpu_custom_call.1} parent=1 // pred_region
      _
    $region9: #{tpu_custom_call.1} parent=1 // pred_fallthru
      _
    // Predicated region
    $region10: #{tpu_custom_call.1} parent=1 // pred_check
      _
    $region11: #{tpu_custom_call.1} parent=1 // pred_check_branch
      %23 = sbr.rel (0) target = $region13
    $region12: #{tpu_custom_call.1} parent=1 // pred_region
      _
    $region13: #{tpu_custom_call.1} parent=1 // pred_fallthru
      _
    // Predicated region
    $region14: #{tpu_custom_call.1} parent=1 // pred_check
      _
    $region15: #{tpu_custom_call.1} parent=1 // pred_check_branch
      %25 = sbr.rel (0) target = $region17
    $region16: #{tpu_custom_call.1} parent=1 // pred_region
      %26 = dma.done [#allocation3], 128
    $region17: #{tpu_custom_call.1} parent=1 // pred_fallthru
      _
    %v27 = vld [vmem:[#allocation2] sm:$0xff]
    %v28 = vrot.slane %v27, 4
    %v29 = vadd.f32 %v27, %v28
    %v30 = vrot.slane %v29, 2
    %v31 = vadd.f32 %v29, %v30
    %v32 = vrot.slane %v31, 1
    %v33 = vadd.f32 %v31, %v32
    %v34 = vmul.f32 %v33, 0.125
    %v35 = vsub.f32 %v27, %v34
    %v36 = vmul.f32 %v35, %v35
    %v37 = vrot.slane %v36, 4
    %v38 = vadd.f32 %v36, %v37
    %v39 = vrot.slane %v38, 2
    %v40 = vadd.f32 %v38, %v39
    %v41 = vrot.slane %v40, 1
    %v42 = vadd.f32 %v40, %v41
    %v43 = vmul.f32 %v42, 0.125
    %v44 = vadd.f32 %v43, 1e-05
    %v45 = vrsqrt.pop %v44
    %v46 = vld [vmem:[%s1] sm:$0x1]
    %v47 = vmul.f32 %v46, %v45
    %v48 = vld [vmem:[%s2] sm:$0x1]
    %v49 = vmul.f32 %v34, %v47
    %v50 = vsub.f32 %v48, %v49
    %v52 = vlaneseq
    %v53 = vshrl.u32 %v52, 7
    %v54 = vsub.s32 0, %v53
    %v55 = vrot.slane %v47, %v54
    %v57 = vmul.f32 %v27, %v55
    %v59 = vlaneseq
    %v60 = vshrl.u32 %v59, 7
    %v61 = vsub.s32 0, %v60
    %v62 = vrot.slane %v50, %v61
    %v64 = vadd.f32 %v57, %v62
    %65 = vst [vmem:[#allocation5] sm:$0xff] %v64
    // Predicated region
    $region18: #{tpu_custom_call.1} parent=1 // pred_check
      _
    $region19: #{tpu_custom_call.1} parent=1 // pred_check_branch
      %67 = sbr.rel (0) target = $region21
    $region20: #{tpu_custom_call.1} parent=1 // pred_region
      %s69 = ssub.s32 128, 128
      %70 = vsyncadd [#allocation4], %s69
      %s72 = sshll.u32 [#allocation5], 4
      %s73 = int_to_ptr.vmem [resolvable:$true] %s72
      %75 = dma.vmem_to_hbm [thread:$0]  %s73, 128, %s3, [#allocation4]
    $region21: #{tpu_custom_call.1} parent=1 // pred_fallthru
      _
    // Predicated region
    $region22: #{tpu_custom_call.1} parent=1 // pred_check
      _
    $region23: #{tpu_custom_call.1} parent=1 // pred_check_branch
      %77 = sbr.rel (0) target = $region25
    $region24: #{tpu_custom_call.1} parent=1 // pred_region
      %78 = dma.done [#allocation4], 128
    $region25: #{tpu_custom_call.1} parent=1 // pred_fallthru
      _
    %79 = vsyncpa [#allocation3], 1
    %80 = vsyncpa [#allocation4], 1

</llo_original>
